<compile_context>
chip_gen: v5e
topology: v5e:2x2
jax: 0.10.0
libtpu: 0.0.40
codegen_flags: <defaults>
</compile_context>

<pallas_src>
import jax
import jax.numpy as jnp
from jax.experimental import pallas as pl
from jax.experimental.pallas import tpu as pltpu

IN_DIM = 768
H1 = 64
H2 = 32
OUT_DIM = 2
OUT_PAD = 128  # lane-dense padded logits width


def _round_up(n, m):
    return ((n + m - 1) // m) * m


def mlp_kernel(x_ref, w1_ref, b1_ref, w2_ref, b2_ref, w3_ref, b3_ref, o_ref):
    # Layer 1: Linear(768 -> 64) + Tanh
    h1 = jnp.dot(x_ref[...], w1_ref[...], preferred_element_type=jnp.float32)
    h1 = jnp.tanh(h1 + b1_ref[...])
    # Layer 2: Linear(64 -> 32) + Tanh
    h2 = jnp.dot(h1, w2_ref[...], preferred_element_type=jnp.float32)
    h2 = jnp.tanh(h2 + b2_ref[...])
    # Layer 3: Linear(32 -> 128-padded logits); lanes 2..127 are zero.
    o_ref[...] = (
        jnp.dot(h2, w3_ref[...], preferred_element_type=jnp.float32) + b3_ref[...]
    )


def malicious_class_detector(x, params, *, batch_tile=1024):
    """x: (B, 768) float32 -> (B, 2) float32 logits."""
    w1, b1, w2, b2, w3, b3 = params
    B = x.shape[0]

    # Clamp the tile to the (8-aligned) batch so small batches don't allocate
    # a huge mostly-padded tile, then pad B up to a multiple of the tile.
    bt = min(_round_up(batch_tile, 8), _round_up(B, 8))
    B_pad = _round_up(B, bt)
    if B_pad != B:
        x = jnp.pad(x, ((0, B_pad - B), (0, 0)))

    # Pad the last layer to 128 output lanes for lane-dense (unmasked) stores.
    w3p = jnp.pad(w3, ((0, 0), (0, OUT_PAD - OUT_DIM)))
    b3p = jnp.pad(b3, ((0, 0), (0, OUT_PAD - OUT_DIM)))

    grid = (B_pad // bt,)
    full = lambda shape: pl.BlockSpec(shape, lambda i: (0, 0))

    out = pl.pallas_call(
        mlp_kernel,
        out_shape=jax.ShapeDtypeStruct((B_pad, OUT_PAD), jnp.float32),
        grid_spec=pltpu.PrefetchScalarGridSpec(
            num_scalar_prefetch=0,
            grid=grid,
            in_specs=[
                pl.BlockSpec((bt, IN_DIM), lambda i: (i, 0)),  # x tile (streamed)
                full((IN_DIM, H1)),      # W1 (resident)
                full((1, H1)),           # b1
                full((H1, H2)),          # W2
                full((1, H2)),           # b2
                full((H2, OUT_PAD)),     # W3 (lane-padded)
                full((1, OUT_PAD)),      # b3 (lane-padded)
            ],
            out_specs=pl.BlockSpec((bt, OUT_PAD), lambda i: (i, 0)),
        ),
        compiler_params=pltpu.CompilerParams(
            dimension_semantics=("parallel",),  # batch axis shards across TCs on v7x
        ),
    )(x, w1, b1, w2, b2, w3p, b3p)

    return out[:B, :OUT_DIM]


def init_params(key):
    """Deterministic synthetic params matching nn.Linear shapes.

    PyTorch nn.Linear(in, out) uses U(-1/sqrt(in), 1/sqrt(in)) for weight and bias;
    weights are stored transposed ((in, out)) so the kernel computes x @ W."""
    ks = jax.random.split(key, 6)

    def lin(kw, kb, fan_in, fan_out):
        bound = 1.0 / jnp.sqrt(jnp.float32(fan_in))
        w = jax.random.uniform(kw, (fan_in, fan_out), jnp.float32, -bound, bound)
        b = jax.random.uniform(kb, (1, fan_out), jnp.float32, -bound, bound)
        return w, b

    w1, b1 = lin(ks[0], ks[1], IN_DIM, H1)
    w2, b2 = lin(ks[2], ks[3], H1, H2)
    w3, b3 = lin(ks[4], ks[5], H2, OUT_DIM)
    return (w1, b1, w2, b2, w3, b3)


def reference(x, params):
    w1, b1, w2, b2, w3, b3 = params
    h1 = jnp.tanh(x @ w1 + b1)
    h2 = jnp.tanh(h1 @ w2 + b2)
    return h2 @ w3 + b3


if __name__ == "__main__":
    key = jax.random.PRNGKey(0)
    k_x, k_p = jax.random.split(key)

    # Small, non-multiple-of-8 batch to exercise the padding path.
    B = 20
    x = jax.random.normal(k_x, (B, IN_DIM), dtype=jnp.float32)
    params = init_params(k_p)

    out = malicious_class_detector(x, params)
    out = jax.block_until_ready(out)

    ref = reference(x, params)
    assert out.shape == (B, OUT_DIM)
    assert jnp.allclose(out, ref, atol=1e-5, rtol=1e-5), "mismatch vs reference"

    print("KERNEL_OK")
</pallas_src>

<mosaic_0001>
module attributes {stable_mosaic.version = 11 : i64} {
  func.func @mlp_kernel(%arg0: i32, %arg1: memref<24x768xf32, #tpu.memory_space<vmem>>, %arg2: memref<768x64xf32, #tpu.memory_space<vmem>>, %arg3: memref<1x64xf32, #tpu.memory_space<vmem>>, %arg4: memref<64x32xf32, #tpu.memory_space<vmem>>, %arg5: memref<1x32xf32, #tpu.memory_space<vmem>>, %arg6: memref<32x128xf32, #tpu.memory_space<vmem>>, %arg7: memref<1x128xf32, #tpu.memory_space<vmem>>, %arg8: memref<24x128xf32, #tpu.memory_space<vmem>>) attributes {dimension_semantics = [#tpu.dimension_semantics<parallel>], iteration_bounds = array<i64: 1>, scalar_prefetch = 0 : i64, scratch_operands = 0 : i64, tpu.core_type = #tpu.core_type<tc>, window_params = [{transform_indices = @transform_0, window_bounds = array<i64: 24, 768>}, {pipeline_mode = #tpu.pipeline_mode<synchronous>, transform_indices = @transform_1, window_bounds = array<i64: 768, 64>}, {pipeline_mode = #tpu.pipeline_mode<synchronous>, transform_indices = @transform_2, window_bounds = array<i64: 1, 64>}, {pipeline_mode = #tpu.pipeline_mode<synchronous>, transform_indices = @transform_3, window_bounds = array<i64: 64, 32>}, {pipeline_mode = #tpu.pipeline_mode<synchronous>, transform_indices = @transform_4, window_bounds = array<i64: 1, 32>}, {pipeline_mode = #tpu.pipeline_mode<synchronous>, transform_indices = @transform_5, window_bounds = array<i64: 32, 128>}, {pipeline_mode = #tpu.pipeline_mode<synchronous>, transform_indices = @transform_6, window_bounds = array<i64: 1, 128>}, {transform_indices = @transform_7, window_bounds = array<i64: 24, 128>}]} {
    %c0 = arith.constant 0 : index
    %c0_0 = arith.constant 0 : index
    %0 = vector.load %arg1[%c0, %c0_0] : memref<24x768xf32, #tpu.memory_space<vmem>>, vector<24x768xf32>
    %c0_1 = arith.constant 0 : index
    %c0_2 = arith.constant 0 : index
    %1 = vector.load %arg2[%c0_1, %c0_2] : memref<768x64xf32, #tpu.memory_space<vmem>>, vector<768x64xf32>
    %cst = arith.constant dense<0.000000e+00> : vector<24x64xf32>
    %2 = tpu.matmul %0, %1, %cst {dimension_numbers = #tpu.dot_dimension_numbers<[1], [0], [0], [1], [0, 0, 1, 1], [], []>} : vector<24x768xf32>, vector<768x64xf32>, vector<24x64xf32> -> vector<24x64xf32>
    %c0_3 = arith.constant 0 : index
    %c0_4 = arith.constant 0 : index
    %3 = vector.load %arg3[%c0_3, %c0_4] : memref<1x64xf32, #tpu.memory_space<vmem>>, vector<1x64xf32>
    %4 = vector.broadcast %3 : vector<1x64xf32> to vector<24x64xf32>
    %5 = arith.addf %2, %4 : vector<24x64xf32>
    %6 = math.tanh %5 : vector<24x64xf32>
    %c0_5 = arith.constant 0 : index
    %c0_6 = arith.constant 0 : index
    %7 = vector.load %arg4[%c0_5, %c0_6] : memref<64x32xf32, #tpu.memory_space<vmem>>, vector<64x32xf32>
    %cst_7 = arith.constant dense<0.000000e+00> : vector<24x32xf32>
    %8 = tpu.matmul %6, %7, %cst_7 {dimension_numbers = #tpu.dot_dimension_numbers<[1], [0], [0], [1], [0, 0, 1, 1], [], []>} : vector<24x64xf32>, vector<64x32xf32>, vector<24x32xf32> -> vector<24x32xf32>
    %c0_8 = arith.constant 0 : index
    %c0_9 = arith.constant 0 : index
    %9 = vector.load %arg5[%c0_8, %c0_9] : memref<1x32xf32, #tpu.memory_space<vmem>>, vector<1x32xf32>
    %10 = vector.broadcast %9 : vector<1x32xf32> to vector<24x32xf32>
    %11 = arith.addf %8, %10 : vector<24x32xf32>
    %12 = math.tanh %11 : vector<24x32xf32>
    %c0_10 = arith.constant 0 : index
    %c0_11 = arith.constant 0 : index
    %13 = vector.load %arg6[%c0_10, %c0_11] : memref<32x128xf32, #tpu.memory_space<vmem>>, vector<32x128xf32>
    %cst_12 = arith.constant dense<0.000000e+00> : vector<24x128xf32>
    %14 = tpu.matmul %12, %13, %cst_12 {dimension_numbers = #tpu.dot_dimension_numbers<[1], [0], [0], [1], [0, 0, 1, 1], [], []>} : vector<24x32xf32>, vector<32x128xf32>, vector<24x128xf32> -> vector<24x128xf32>
    %c0_13 = arith.constant 0 : index
    %c0_14 = arith.constant 0 : index
    %15 = vector.load %arg7[%c0_13, %c0_14] : memref<1x128xf32, #tpu.memory_space<vmem>>, vector<1x128xf32>
    %16 = vector.broadcast %15 : vector<1x128xf32> to vector<24x128xf32>
    %17 = arith.addf %14, %16 : vector<24x128xf32>
    %c0_15 = arith.constant 0 : index
    %c0_16 = arith.constant 0 : index
    %18 = vector.load %arg8[%c0_15, %c0_16] : memref<24x128xf32, #tpu.memory_space<vmem>>, vector<24x128xf32>
    tpu.vector_store %arg8[%c0_15, %c0_16], %17 {strides = array<i32>} : memref<24x128xf32, #tpu.memory_space<vmem>>, vector<24x128xf32>,
    return
  }
  func.func @transform_0(%arg0: i32) -> (i32, i32) {
    %c0_i32 = arith.constant 0 : i32
    %c0_i32_0 = arith.constant 0 : i32
    return %arg0, %c0_i32 : i32, i32
  }
  func.func @transform_1(%arg0: i32) -> (i32, i32) {
    %c0_i32 = arith.constant 0 : i32
    %c0_i32_0 = arith.constant 0 : i32
    %c0_i32_1 = arith.constant 0 : i32
    return %c0_i32, %c0_i32_0 : i32, i32
  }
  func.func @transform_2(%arg0: i32) -> (i32, i32) {
    %c0_i32 = arith.constant 0 : i32
    %c0_i32_0 = arith.constant 0 : i32
    %c0_i32_1 = arith.constant 0 : i32
    return %c0_i32, %c0_i32_0 : i32, i32
  }
  func.func @transform_3(%arg0: i32) -> (i32, i32) {
    %c0_i32 = arith.constant 0 : i32
    %c0_i32_0 = arith.constant 0 : i32
    %c0_i32_1 = arith.constant 0 : i32
    return %c0_i32, %c0_i32_0 : i32, i32
  }
  func.func @transform_4(%arg0: i32) -> (i32, i32) {
    %c0_i32 = arith.constant 0 : i32
    %c0_i32_0 = arith.constant 0 : i32
    %c0_i32_1 = arith.constant 0 : i32
    return %c0_i32, %c0_i32_0 : i32, i32
  }
  func.func @transform_5(%arg0: i32) -> (i32, i32) {
    %c0_i32 = arith.constant 0 : i32
    %c0_i32_0 = arith.constant 0 : i32
    %c0_i32_1 = arith.constant 0 : i32
    return %c0_i32, %c0_i32_0 : i32, i32
  }
  func.func @transform_6(%arg0: i32) -> (i32, i32) {
    %c0_i32 = arith.constant 0 : i32
    %c0_i32_0 = arith.constant 0 : i32
    %c0_i32_1 = arith.constant 0 : i32
    return %c0_i32, %c0_i32_0 : i32, i32
  }
  func.func @transform_7(%arg0: i32) -> (i32, i32) {
    %c0_i32 = arith.constant 0 : i32
    %c0_i32_0 = arith.constant 0 : i32
    return %arg0, %c0_i32 : i32, i32
  }
}

</mosaic_0001>

<llo_original>
// kernel: tpu_custom_call.1
$region0: #{tpu_custom_call.1}
  #allocation0 [shape = 'u32[]', space=smem, size = 0x4, offset = 0x4, fixed_abs, tag = 'smem constant byte address 0x4 - core index']
  #allocation1 [shape = 'u32[72,128]{1,0:T(1,128)}', space=vmem, size = 0x9000, scoped, tag = 'internal scratch']
  %s0 = inlined_call_operand.vmem [shape: f32[24,768], index: 0, kind: input, shape index: {}]
  %s1 = inlined_call_operand.vmem [shape: f32[768,64], index: 1, kind: input, shape index: {}]
  %s2 = inlined_call_operand.vmem [shape: f32[1,64], index: 2, kind: input, shape index: {}]
  %s3 = inlined_call_operand.vmem [shape: f32[64,32], index: 3, kind: input, shape index: {}]
  %s4 = inlined_call_operand.vmem [shape: f32[1,32], index: 4, kind: input, shape index: {}]
  %s5 = inlined_call_operand.vmem [shape: f32[32,128], index: 5, kind: input, shape index: {}]
  %s6 = inlined_call_operand.vmem [shape: f32[1,128], index: 6, kind: input, shape index: {}]
  %s7 = inlined_call_operand.hbm [shape: f32[24,128], index: 7, kind: output, shape index: {}]
  %s8 = sld [smem:[#allocation0]]
  $region38: #{tpu_custom_call.1} parent=0
    _
  %s10 = ssub.s32 1, %s8
  %s11 = scalar_select 0, %s10, %s8
  $region1: #{tpu_custom_call.1} parent=0
    #allocation2 [shape = 'u8[12288]{0}', space=vmem, size = 0x3000, scoped, tag = 'output window, operand 0, single buffered']
    #allocation3 [shape = 's32[1]{0}', space=sflag, size = 0x4, scoped, tag = 'scoped memory for tpu_custom_call.1']
    %12 = vsyncpa [#allocation3], 0
    // Predicated region
    $region2: #{tpu_custom_call.1} parent=1 // pred_check
      _
    $region3: #{tpu_custom_call.1} parent=1 // pred_check_branch
      %14 = sbr.rel (0) target = $region5
    $region4: #{tpu_custom_call.1} parent=1 // pred_region
      _
    $region5: #{tpu_custom_call.1} parent=1 // pred_fallthru
      _
    // Predicated region
    $region6: #{tpu_custom_call.1} parent=1 // pred_check
      _
    $region7: #{tpu_custom_call.1} parent=1 // pred_check_branch
      %16 = sbr.rel (0) target = $region9
    $region8: #{tpu_custom_call.1} parent=1 // pred_region
      _
    $region9: #{tpu_custom_call.1} parent=1 // pred_fallthru
      _
    // Predicated region
    $region10: #{tpu_custom_call.1} parent=1 // pred_check
      _
    $region11: #{tpu_custom_call.1} parent=1 // pred_check_branch
      %18 = sbr.rel (0) target = $region13
    $region12: #{tpu_custom_call.1} parent=1 // pred_region
      _
    $region13: #{tpu_custom_call.1} parent=1 // pred_fallthru
      _
    // Predicated region
    $region14: #{tpu_custom_call.1} parent=1 // pred_check
      _
    $region15: #{tpu_custom_call.1} parent=1 // pred_check_branch
      %20 = sbr.rel (0) target = $region17
    $region16: #{tpu_custom_call.1} parent=1 // pred_region
      _
    $region17: #{tpu_custom_call.1} parent=1 // pred_fallthru
      _
    // Predicated region
    $region18: #{tpu_custom_call.1} parent=1 // pred_check
      _
    $region19: #{tpu_custom_call.1} parent=1 // pred_check_branch
      %22 = sbr.rel (0) target = $region21
    $region20: #{tpu_custom_call.1} parent=1 // pred_region
      _
    $region21: #{tpu_custom_call.1} parent=1 // pred_fallthru
      _
    // Predicated region
    $region22: #{tpu_custom_call.1} parent=1 // pred_check
      _
    $region23: #{tpu_custom_call.1} parent=1 // pred_check_branch
      %24 = sbr.rel (0) target = $region25
    $region24: #{tpu_custom_call.1} parent=1 // pred_region
      _
    $region25: #{tpu_custom_call.1} parent=1 // pred_fallthru
      _
    // Predicated region
    $region26: #{tpu_custom_call.1} parent=1 // pred_check
      _
    $region27: #{tpu_custom_call.1} parent=1 // pred_check_branch
      %26 = sbr.rel (0) target = $region29
    $region28: #{tpu_custom_call.1} parent=1 // pred_region
      _
    $region29: #{tpu_custom_call.1} parent=1 // pred_fallthru
      _
    %v27 = vld [vmem:[%s0] sm:$0xff]
    %v28 = vld [vmem:[%s0 + $0x8] sm:$0xff]
    %v29 = vld [vmem:[%s0 + $0x10] sm:$0xff]
    %v30 = vld [vmem:[%s0 + $0x18] sm:$0xff]
    %v31 = vld [vmem:[%s0 + $0x20] sm:$0xff]
    %v32 = vld [vmem:[%s0 + $0x28] sm:$0xff]
    %v33 = vld [vmem:[%s0 + $0x30] sm:$0xff]
    %v34 = vld [vmem:[%s0 + $0x38] sm:$0xff]
    %v35 = vld [vmem:[%s0 + $0x40] sm:$0xff]
    %v36 = vld [vmem:[%s0 + $0x48] sm:$0xff]
    %v37 = vld [vmem:[%s0 + $0x50] sm:$0xff]
    %v38 = vld [vmem:[%s0 + $0x58] sm:$0xff]
    %v39 = vld [vmem:[%s0 + $0x60] sm:$0xff]
    %v40 = vld [vmem:[%s0 + $0x68] sm:$0xff]
    %v41 = vld [vmem:[%s0 + $0x70] sm:$0xff]
    %v42 = vld [vmem:[%s0 + $0x78] sm:$0xff]
    %v43 = vld [vmem:[%s0 + $0x80] sm:$0xff]
    %v44 = vld [vmem:[%s0 + $0x88] sm:$0xff]
    %v45 = vld [vmem:[%s1] sm:$0xff]
    %v46 = vld [vmem:[%s1 + $0x8] sm:$0xff]
    %v47 = vld [vmem:[%s1 + $0x10] sm:$0xff]
    %v48 = vld [vmem:[%s1 + $0x18] sm:$0xff]
    %v49 = vld [vmem:[%s1 + $0x20] sm:$0xff]
    %v50 = vld [vmem:[%s1 + $0x28] sm:$0xff]
    %v51 = vld [vmem:[%s1 + $0x30] sm:$0xff]
    %v52 = vld [vmem:[%s1 + $0x38] sm:$0xff]
    %v53 = vld [vmem:[%s1 + $0x40] sm:$0xff]
    %v54 = vld [vmem:[%s1 + $0x48] sm:$0xff]
    %v55 = vld [vmem:[%s1 + $0x50] sm:$0xff]
    %v56 = vld [vmem:[%s1 + $0x58] sm:$0xff]
    %v57 = vld [vmem:[%s1 + $0x60] sm:$0xff]
    %v58 = vld [vmem:[%s1 + $0x68] sm:$0xff]
    %v59 = vld [vmem:[%s1 + $0x70] sm:$0xff]
    %v60 = vld [vmem:[%s1 + $0x78] sm:$0xff]
    %v61 = vld [vmem:[%s1 + $0x80] sm:$0xff]
    %v62 = vld [vmem:[%s1 + $0x88] sm:$0xff]
    %v63 = vld [vmem:[%s1 + $0x90] sm:$0xff]
    %v64 = vld [vmem:[%s1 + $0x98] sm:$0xff]
    %v65 = vld [vmem:[%s1 + $0xa0] sm:$0xff]
    %v66 = vld [vmem:[%s1 + $0xa8] sm:$0xff]
    %v67 = vld [vmem:[%s1 + $0xb0] sm:$0xff]
    %v68 = vld [vmem:[%s1 + $0xb8] sm:$0xff]
    %v69 = vld [vmem:[%s1 + $0xc0] sm:$0xff]
    %v70 = vld [vmem:[%s1 + $0xc8] sm:$0xff]
    %v71 = vld [vmem:[%s1 + $0xd0] sm:$0xff]
    %v72 = vld [vmem:[%s1 + $0xd8] sm:$0xff]
    %v73 = vld [vmem:[%s1 + $0xe0] sm:$0xff]
    %v74 = vld [vmem:[%s1 + $0xe8] sm:$0xff]
    %v75 = vld [vmem:[%s1 + $0xf0] sm:$0xff]
    %v76 = vld [vmem:[%s1 + $0xf8] sm:$0xff]
    %v77 = vld [vmem:[%s1 + $0x100] sm:$0xff]
    %v78 = vld [vmem:[%s1 + $0x108] sm:$0xff]
    %v79 = vld [vmem:[%s1 + $0x110] sm:$0xff]
    %v80 = vld [vmem:[%s1 + $0x118] sm:$0xff]
    %v81 = vld [vmem:[%s1 + $0x120] sm:$0xff]
    %v82 = vld [vmem:[%s1 + $0x128] sm:$0xff]
    %v83 = vld [vmem:[%s1 + $0x130] sm:$0xff]
    %v84 = vld [vmem:[%s1 + $0x138] sm:$0xff]
    %v85 = vld [vmem:[%s1 + $0x140] sm:$0xff]
    %v86 = vld [vmem:[%s1 + $0x148] sm:$0xff]
    %v87 = vld [vmem:[%s1 + $0x150] sm:$0xff]
    %v88 = vld [vmem:[%s1 + $0x158] sm:$0xff]
    %v89 = vld [vmem:[%s1 + $0x160] sm:$0xff]
    %v90 = vld [vmem:[%s1 + $0x168] sm:$0xff]
    %v91 = vld [vmem:[%s1 + $0x170] sm:$0xff]
    %v92 = vld [vmem:[%s1 + $0x178] sm:$0xff]
    %v93 = vld [vmem:[%s1 + $0x180] sm:$0xff]
    %v94 = vld [vmem:[%s1 + $0x188] sm:$0xff]
    %v95 = vld [vmem:[%s1 + $0x190] sm:$0xff]
    %v96 = vld [vmem:[%s1 + $0x198] sm:$0xff]
    %v97 = vld [vmem:[%s1 + $0x1a0] sm:$0xff]
    %v98 = vld [vmem:[%s1 + $0x1a8] sm:$0xff]
    %v99 = vld [vmem:[%s1 + $0x1b0] sm:$0xff]
    %v100 = vld [vmem:[%s1 + $0x1b8] sm:$0xff]
    %v101 = vld [vmem:[%s1 + $0x1c0] sm:$0xff]
    %v102 = vld [vmem:[%s1 + $0x1c8] sm:$0xff]
    %v103 = vld [vmem:[%s1 + $0x1d0] sm:$0xff]
    %v104 = vld [vmem:[%s1 + $0x1d8] sm:$0xff]
    %v105 = vld [vmem:[%s1 + $0x1e0] sm:$0xff]
    %v106 = vld [vmem:[%s1 + $0x1e8] sm:$0xff]
    %v107 = vld [vmem:[%s1 + $0x1f0] sm:$0xff]
    %v108 = vld [vmem:[%s1 + $0x1f8] sm:$0xff]
    %v109 = vld [vmem:[%s1 + $0x200] sm:$0xff]
    %v110 = vld [vmem:[%s1 + $0x208] sm:$0xff]
    %v111 = vld [vmem:[%s1 + $0x210] sm:$0xff]
    %v112 = vld [vmem:[%s1 + $0x218] sm:$0xff]
    %v113 = vld [vmem:[%s1 + $0x220] sm:$0xff]
    %v114 = vld [vmem:[%s1 + $0x228] sm:$0xff]
    %v115 = vld [vmem:[%s1 + $0x230] sm:$0xff]
    %v116 = vld [vmem:[%s1 + $0x238] sm:$0xff]
    %v117 = vld [vmem:[%s1 + $0x240] sm:$0xff]
    %v118 = vld [vmem:[%s1 + $0x248] sm:$0xff]
    %v119 = vld [vmem:[%s1 + $0x250] sm:$0xff]
    %v120 = vld [vmem:[%s1 + $0x258] sm:$0xff]
    %v121 = vld [vmem:[%s1 + $0x260] sm:$0xff]
    %v122 = vld [vmem:[%s1 + $0x268] sm:$0xff]
    %v123 = vld [vmem:[%s1 + $0x270] sm:$0xff]
    %v124 = vld [vmem:[%s1 + $0x278] sm:$0xff]
    %v125 = vld [vmem:[%s1 + $0x280] sm:$0xff]
    %v126 = vld [vmem:[%s1 + $0x288] sm:$0xff]
    %v127 = vld [vmem:[%s1 + $0x290] sm:$0xff]
    %v128 = vld [vmem:[%s1 + $0x298] sm:$0xff]
    %v129 = vld [vmem:[%s1 + $0x2a0] sm:$0xff]
    %v130 = vld [vmem:[%s1 + $0x2a8] sm:$0xff]
    %v131 = vld [vmem:[%s1 + $0x2b0] sm:$0xff]
    %v132 = vld [vmem:[%s1 + $0x2b8] sm:$0xff]
    %v133 = vld [vmem:[%s1 + $0x2c0] sm:$0xff]
    %v134 = vld [vmem:[%s1 + $0x2c8] sm:$0xff]
    %v135 = vld [vmem:[%s1 + $0x2d0] sm:$0xff]
    %v136 = vld [vmem:[%s1 + $0x2d8] sm:$0xff]
    %v137 = vld [vmem:[%s1 + $0x2e0] sm:$0xff]
    %v138 = vld [vmem:[%s1 + $0x2e8] sm:$0xff]
    %v139 = vld [vmem:[%s1 + $0x2f0] sm:$0xff]
    %v140 = vld [vmem:[%s1 + $0x2f8] sm:$0xff]
    %v141 = vld [vmem:[%s2] sm:$0x1]
    %v143 = vperm.slane %v141, 0
    %145 = vmatpush.msra.mxu0 %v60
    %146 = vmatpush.msra.mxu0 %v59
    %147 = vmatpush.msra.mxu0 %v58
    %148 = vmatpush.msra.mxu0 %v57
    %149 = vmatpush.msra.mxu0 %v56
    %150 = vmatpush.msra.mxu0 %v55
    %151 = vmatpush.msra.mxu0 %v54
    %152 = vmatpush.msra.mxu0 %v53
    %153 = vmatpush.msra.mxu0 %v52
    %154 = vmatpush.msra.mxu0 %v51
    %155 = vmatpush.msra.mxu0 %v50
    %156 = vmatpush.msra.mxu0 %v49
    %157 = vmatpush.msra.mxu0 %v48
    %158 = vmatpush.msra.mxu0 %v47
    %159 = vmatpush.msra.mxu0 %v46
    %160 = vmatpush.msra.mxu0 %v45
    %161 = vmatmul.f32.gmra.mxu0 %v27
    %v162 = vpop.f32.mrf.mxu0
    %v163 = vadd.f32 %v143, %v162
    %164 = vmatmul.f32.gmra.mxu0 %v33
    %v165 = vpop.f32.mrf.mxu0
    %v166 = vadd.f32 %v143, %v165
    %167 = vmatmul.f32.gmra.mxu0 %v39
    %v168 = vpop.f32.mrf.mxu0
    %v169 = vadd.f32 %v143, %v168
    %170 = vdwg.mxu0
    %171 = vmatpush.msra.mxu0 %v76
    %172 = vmatpush.msra.mxu0 %v75
    %173 = vmatpush.msra.mxu0 %v74
    %174 = vmatpush.msra.mxu0 %v73
    %175 = vmatpush.msra.mxu0 %v72
    %176 = vmatpush.msra.mxu0 %v71
    %177 = vmatpush.msra.mxu0 %v70
    %178 = vmatpush.msra.mxu0 %v69
    %179 = vmatpush.msra.mxu0 %v68
    %180 = vmatpush.msra.mxu0 %v67
    %181 = vmatpush.msra.mxu0 %v66
    %182 = vmatpush.msra.mxu0 %v65
    %183 = vmatpush.msra.mxu0 %v64
    %184 = vmatpush.msra.mxu0 %v63
    %185 = vmatpush.msra.mxu0 %v62
    %186 = vmatpush.msra.mxu0 %v61
    %187 = vmatmul.f32.gmra.mxu0 %v28
    %v188 = vpop.f32.mrf.mxu0
    %v189 = vadd.f32 %v163, %v188
    %190 = vmatmul.f32.gmra.mxu0 %v34
    %v191 = vpop.f32.mrf.mxu0
    %v192 = vadd.f32 %v166, %v191
    %193 = vmatmul.f32.gmra.mxu0 %v40
    %v194 = vpop.f32.mrf.mxu0
    %v195 = vadd.f32 %v169, %v194
    %196 = vdwg.mxu0
    %197 = vmatpush.msra.mxu0 %v92
    %198 = vmatpush.msra.mxu0 %v91
    %199 = vmatpush.msra.mxu0 %v90
    %200 = vmatpush.msra.mxu0 %v89
    %201 = vmatpush.msra.mxu0 %v88
    %202 = vmatpush.msra.mxu0 %v87
    %203 = vmatpush.msra.mxu0 %v86
    %204 = vmatpush.msra.mxu0 %v85
    %205 = vmatpush.msra.mxu0 %v84
    %206 = vmatpush.msra.mxu0 %v83
    %207 = vmatpush.msra.mxu0 %v82
    %208 = vmatpush.msra.mxu0 %v81
    %209 = vmatpush.msra.mxu0 %v80
    %210 = vmatpush.msra.mxu0 %v79
    %211 = vmatpush.msra.mxu0 %v78
    %212 = vmatpush.msra.mxu0 %v77
    %213 = vmatmul.f32.gmra.mxu0 %v29
    %v214 = vpop.f32.mrf.mxu0
    %v215 = vadd.f32 %v189, %v214
    %216 = vmatmul.f32.gmra.mxu0 %v35
    %v217 = vpop.f32.mrf.mxu0
    %v218 = vadd.f32 %v192, %v217
    %219 = vmatmul.f32.gmra.mxu0 %v41
    %v220 = vpop.f32.mrf.mxu0
    %v221 = vadd.f32 %v195, %v220
    %222 = vdwg.mxu0
    %223 = vmatpush.msra.mxu0 %v108
    %224 = vmatpush.msra.mxu0 %v107
    %225 = vmatpush.msra.mxu0 %v106
    %226 = vmatpush.msra.mxu0 %v105
    %227 = vmatpush.msra.mxu0 %v104
    %228 = vmatpush.msra.mxu0 %v103
    %229 = vmatpush.msra.mxu0 %v102
    %230 = vmatpush.msra.mxu0 %v101
    %231 = vmatpush.msra.mxu0 %v100
    %232 = vmatpush.msra.mxu0 %v99
    %233 = vmatpush.msra.mxu0 %v98
    %234 = vmatpush.msra.mxu0 %v97
    %235 = vmatpush.msra.mxu0 %v96
    %236 = vmatpush.msra.mxu0 %v95
    %237 = vmatpush.msra.mxu0 %v94
    %238 = vmatpush.msra.mxu0 %v93
    %239 = vmatmul.f32.gmra.mxu0 %v30
    %v240 = vpop.f32.mrf.mxu0
    %v241 = vadd.f32 %v215, %v240
    %242 = vmatmul.f32.gmra.mxu0 %v36
    %v243 = vpop.f32.mrf.mxu0
    %v244 = vadd.f32 %v218, %v243
    %245 = vmatmul.f32.gmra.mxu0 %v42
    %v246 = vpop.f32.mrf.mxu0
    %v247 = vadd.f32 %v221, %v246
    %248 = vdwg.mxu0
    %249 = vmatpush.msra.mxu0 %v124
    %250 = vmatpush.msra.mxu0 %v123
    %251 = vmatpush.msra.mxu0 %v122
    %252 = vmatpush.msra.mxu0 %v121
    %253 = vmatpush.msra.mxu0 %v120
    %254 = vmatpush.msra.mxu0 %v119
    %255 = vmatpush.msra.mxu0 %v118
    %256 = vmatpush.msra.mxu0 %v117
    %257 = vmatpush.msra.mxu0 %v116
    %258 = vmatpush.msra.mxu0 %v115
    %259 = vmatpush.msra.mxu0 %v114
    %260 = vmatpush.msra.mxu0 %v113
    %261 = vmatpush.msra.mxu0 %v112
    %262 = vmatpush.msra.mxu0 %v111
    %263 = vmatpush.msra.mxu0 %v110
    %264 = vmatpush.msra.mxu0 %v109
    %265 = vmatmul.f32.gmra.mxu0 %v31
    %v266 = vpop.f32.mrf.mxu0
    %v267 = vadd.f32 %v241, %v266
    %268 = vmatmul.f32.gmra.mxu0 %v37
    %v269 = vpop.f32.mrf.mxu0
    %v270 = vadd.f32 %v244, %v269
    %271 = vmatmul.f32.gmra.mxu0 %v43
    %v272 = vpop.f32.mrf.mxu0
    %v273 = vadd.f32 %v247, %v272
    %274 = vdwg.mxu0
    %275 = vmatpush.msra.mxu0 %v140
    %276 = vmatpush.msra.mxu0 %v139
    %277 = vmatpush.msra.mxu0 %v138
    %278 = vmatpush.msra.mxu0 %v137
    %279 = vmatpush.msra.mxu0 %v136
    %280 = vmatpush.msra.mxu0 %v135
    %281 = vmatpush.msra.mxu0 %v134
    %282 = vmatpush.msra.mxu0 %v133
    %283 = vmatpush.msra.mxu0 %v132
    %284 = vmatpush.msra.mxu0 %v131
    %285 = vmatpush.msra.mxu0 %v130
    %286 = vmatpush.msra.mxu0 %v129
    %287 = vmatpush.msra.mxu0 %v128
    %288 = vmatpush.msra.mxu0 %v127
    %289 = vmatpush.msra.mxu0 %v126
    %290 = vmatpush.msra.mxu0 %v125
    %291 = vmatmul.f32.gmra.mxu0 %v32
    %v292 = vpop.f32.mrf.mxu0
    %v293 = vadd.f32 %v267, %v292
    %294 = vmatmul.f32.gmra.mxu0 %v38
    %v295 = vpop.f32.mrf.mxu0
    %v296 = vadd.f32 %v270, %v295
    %297 = vmatmul.f32.gmra.mxu0 %v44
    %v298 = vpop.f32.mrf.mxu0
    %v299 = vadd.f32 %v273, %v298
    %300 = vdwg.mxu0
    %v301 = vtanh.pop %v293
    %v302 = vtanh.pop %v296
    %v303 = vtanh.pop %v299
    %v304 = vld [vmem:[%s3] sm:$0xff]
    %v305 = vld [vmem:[%s3 + $0x8] sm:$0xff]
    %v306 = vld [vmem:[%s3 + $0x10] sm:$0xff]
    %v307 = vld [vmem:[%s3 + $0x18] sm:$0xff]
    %v308 = vld [vmem:[%s3 + $0x20] sm:$0xff]
    %v309 = vld [vmem:[%s3 + $0x28] sm:$0xff]
    %v310 = vld [vmem:[%s3 + $0x30] sm:$0xff]
    %v311 = vld [vmem:[%s3 + $0x38] sm:$0xff]
    %v312 = vld [vmem:[%s4] sm:$0x1]
    %v314 = vperm.slane %v312, 0
    %vm316 = vcmask 523264
    %v318 = vsel %vm316, %v301, 0
    %v321 = vsel %vm316, %v302, 0
    %v324 = vsel %vm316, %v303, 0
    %326 = vmatpush.msra.mxu0 0.0
    %327 = vmatpush.msra.mxu0 0.0
    %328 = vmatpush.msra.mxu0 0.0
    %329 = vmatpush.msra.mxu0 0.0
    %330 = vmatpush.msra.mxu0 0.0
    %331 = vmatpush.msra.mxu0 0.0
    %332 = vmatpush.msra.mxu0 0.0
    %333 = vmatpush.msra.mxu0 0.0
    %334 = vmatpush.msra.mxu0 %v311
    %335 = vmatpush.msra.mxu0 %v310
    %336 = vmatpush.msra.mxu0 %v309
    %337 = vmatpush.msra.mxu0 %v308
    %338 = vmatpush.msra.mxu0 %v307
    %339 = vmatpush.msra.mxu0 %v306
    %340 = vmatpush.msra.mxu0 %v305
    %341 = vmatpush.msra.mxu0 %v304
    %342 = vmatmul.f32.gmra.mxu0 %v318
    %v343 = vpop.f32.mrf.mxu0
    %v344 = vadd.f32 %v314, %v343
    %345 = vmatmul.f32.gmra.mxu0 %v321
    %v346 = vpop.f32.mrf.mxu0
    %v347 = vadd.f32 %v314, %v346
    %348 = vmatmul.f32.gmra.mxu0 %v324
    %v349 = vpop.f32.mrf.mxu0
    %v350 = vadd.f32 %v314, %v349
    %351 = vdwg.mxu0
    %v352 = vtanh.pop %v344
    %v353 = vtanh.pop %v347
    %v354 = vtanh.pop %v350
    %v355 = vld [vmem:[%s5] sm:$0xff]
    %v356 = vld [vmem:[%s5 + $0x8] sm:$0xff]
    %v357 = vld [vmem:[%s5 + $0x10] sm:$0xff]
    %v358 = vld [vmem:[%s5 + $0x18] sm:$0xff]
    %v359 = vld [vmem:[%s6] sm:$0x1]
    %v361 = vperm.slane %v359, 0
    %vm363 = vcmask 261120
    %v365 = vsel %vm363, %v352, 0
    %v368 = vsel %vm363, %v353, 0
    %v371 = vsel %vm363, %v354, 0
    %373 = vmatpush.msra.mxu0 0.0
    %374 = vmatpush.msra.mxu0 0.0
    %375 = vmatpush.msra.mxu0 0.0
    %376 = vmatpush.msra.mxu0 0.0
    %377 = vmatpush.msra.mxu0 0.0
    %378 = vmatpush.msra.mxu0 0.0
    %379 = vmatpush.msra.mxu0 0.0
    %380 = vmatpush.msra.mxu0 0.0
    %381 = vmatpush.msra.mxu0 0.0
    %382 = vmatpush.msra.mxu0 0.0
    %383 = vmatpush.msra.mxu0 0.0
    %384 = vmatpush.msra.mxu0 0.0
    %385 = vmatpush.msra.mxu0 %v358
    %386 = vmatpush.msra.mxu0 %v357
    %387 = vmatpush.msra.mxu0 %v356
    %388 = vmatpush.msra.mxu0 %v355
    %389 = vmatmul.f32.gmra.mxu0 %v365
    %v390 = vpop.f32.mrf.mxu0
    %v391 = vadd.f32 %v361, %v390
    %392 = vmatmul.f32.gmra.mxu0 %v368
    %v393 = vpop.f32.mrf.mxu0
    %v394 = vadd.f32 %v361, %v393
    %395 = vmatmul.f32.gmra.mxu0 %v371
    %v396 = vpop.f32.mrf.mxu0
    %v397 = vadd.f32 %v361, %v396
    %398 = vdwg.mxu0
    %399 = vst [vmem:[#allocation2] sm:$0xff] %v391
    %400 = vst [vmem:[#allocation2 + $0x8] sm:$0xff] %v394
    %401 = vst [vmem:[#allocation2 + $0x10] sm:$0xff] %v397
    // Predicated region
    $region30: #{tpu_custom_call.1} parent=1 // pred_check
      _
    $region31: #{tpu_custom_call.1} parent=1 // pred_check_branch
      %403 = sbr.rel (0) target = $region33
    $region32: #{tpu_custom_call.1} parent=1 // pred_region
      %405 = vsyncadd [#allocation3], 0
      %s406 = sshll.u32 [#allocation2], 4
      %s407 = int_to_ptr.vmem [resolvable:$true] %s406
      %s408 = sshll.u32 %s7, 4
      %s409 = int_to_ptr.hbm [resolvable:$true] %s408
      %414 = dma.vmem_to_hbm [thread:$0]  %s407, 384, %s409, [#allocation3], 128, 128, 8
    $region33: #{tpu_custom_call.1} parent=1 // pred_fallthru
      _
    // Predicated region
    $region34: #{tpu_custom_call.1} parent=1 // pred_check
      _
    $region35: #{tpu_custom_call.1} parent=1 // pred_check_branch
      %416 = sbr.rel (0) target = $region37
    $region36: #{tpu_custom_call.1} parent=1 // pred_region
      %418 = dma.done [#allocation3], 384
    $region37: #{tpu_custom_call.1} parent=1 // pred_fallthru
      _
    %419 = vsyncpa [#allocation3], 1

</llo_original>
